<compile_context>
chip_gen: v7x
topology: tpu7x:2x2x1
jax: 0.10.0
libtpu: 0.0.40
codegen_flags: <defaults>
</compile_context>

<pallas_src>
import functools

import jax
import jax.numpy as jnp
from jax.experimental import pallas as pl
from jax.experimental.pallas import tpu as pltpu


def _round_up(x, m):
    return ((x + m - 1) // m) * m


def _ts_sum_kernel(xr_ref, o_ref, *, size, stride, out_l_pad):
    # xr_ref: (stride, tm, Lq_pad)  phase-major view of the input rows
    # o_ref:  (tm, out_l_pad)       lane-dense output tile
    acc = jnp.zeros(o_ref.shape, jnp.float32)
    for p in range(stride):
        # number of window taps that land on phase p:  q*stride + p < size
        nq = (size - p + stride - 1) // stride
        if nq <= 0:
            continue
        row = xr_ref[p]                           # (tm, Lq_pad), loaded once per phase
        for q in range(nq):
            acc = acc + row[:, q:q + out_l_pad]   # contiguous shifted add
    o_ref[...] = acc


def ts_sum(x, size=20, stride=1):
    """Pallas implementation of TsSum.forward. x: (B, F, L)."""
    B, F, L = x.shape
    out_L = (L - size) // stride + 1
    assert out_L >= 1, "seq_length must be >= size"

    R = B * F
    x2 = x.reshape(R, L).astype(jnp.float32)

    # ---- wrapper-side layout plumbing (cheap, memory-bound) ----
    L_pad = _round_up(L, stride)
    Lq = L_pad // stride                       # positions per phase
    q_max = (size - 1) // stride               # max tap offset within a phase
    out_L_pad = _round_up(out_L, 128)          # lane-dense output width
    Lq_pad = _round_up(max(Lq, out_L_pad + q_max), 128)

    # Row tile: multiple of 8 sublanes (f32), capped so the double-buffered
    # working set stays well inside the default scoped VMEM on every gen
    # (v5e 16 MiB / v6e 32 MiB / v7x 32 MiB scoped).
    tm = min(256, _round_up(R, 8))
    vmem_budget = 8 * 1024 * 1024
    while tm > 8 and 2 * 4 * (stride * tm * Lq_pad + tm * out_L_pad) > vmem_budget:
        tm = max(8, (tm // 2 // 8) * 8)
    R_pad = _round_up(R, tm)

    # x[r, u*stride + p]  ->  xr[p, r, u]   (for stride == 1 this is a no-op view)
    xp = jnp.pad(x2, ((0, R_pad - R), (0, L_pad - L)))
    xr = xp.reshape(R_pad, Lq, stride).transpose(2, 0, 1)     # (stride, R_pad, Lq)
    xr = jnp.pad(xr, ((0, 0), (0, 0), (0, Lq_pad - Lq)))      # zero halo / lane pad

    kernel = functools.partial(
        _ts_sum_kernel, size=size, stride=stride, out_l_pad=out_L_pad)

    out_p = pl.pallas_call(
        kernel,
        out_shape=jax.ShapeDtypeStruct((R_pad, out_L_pad), jnp.float32),
        grid_spec=pltpu.PrefetchScalarGridSpec(
            num_scalar_prefetch=0,
            grid=(R_pad // tm,),
            in_specs=[pl.BlockSpec((stride, tm, Lq_pad), lambda i: (0, i, 0))],
            out_specs=pl.BlockSpec((tm, out_L_pad), lambda i: (i, 0)),
        ),
        compiler_params=pltpu.CompilerParams(
            dimension_semantics=("parallel",),
        ),
    )(xr)

    # TODO(synk): for extremely long sequences (stride*tm*Lq_pad*4B per tile
    # exceeding VMEM even at tm=8), add a second grid axis over out_L with a
    # halo'd input band instead of the full lane extent per row tile.

    return out_p[:R, :out_L].reshape(B, F, out_L)


def ts_sum_reference(x, size, stride):
    """Pure-JAX reference mirroring the PyTorch loop."""
    B, F, L = x.shape
    out_L = (L - size) // stride + 1
    cols = []
    for t in range(out_L):
        cols.append(x[:, :, t * stride:t * stride + size].sum(axis=-1))
    return jnp.stack(cols, axis=-1)


if __name__ == "__main__":
    key = jax.random.PRNGKey(0)
    B, F = 2, 4

    # (size, stride, L): the test config from before + the module defaults.
    for (size, stride, L) in [(8, 2, 32), (20, 1, 64)]:
        k, key = jax.random.split(key)
        x = jax.random.normal(k, (B, F, L), dtype=jnp.float32)

        out = jax.block_until_ready(ts_sum(x, size=size, stride=stride))
        ref = ts_sum_reference(x, size, stride)

        assert out.shape == ref.shape, (out.shape, ref.shape)
        assert jnp.allclose(out, ref, atol=1e-5, rtol=1e-5), (
            f"mismatch vs reference for size={size}, stride={stride}")

    print("KERNEL_OK")
</pallas_src>

<mosaic_0001>
module attributes {stable_mosaic.version = 11 : i64} {
  func.func @_ts_sum_kernel(%arg0: i32, %arg1: memref<2x8x256xf32, #tpu.memory_space<vmem>>, %arg2: memref<8x128xf32, #tpu.memory_space<vmem>>) attributes {dimension_semantics = [#tpu.dimension_semantics<parallel>], iteration_bounds = array<i64: 1>, scalar_prefetch = 0 : i64, scratch_operands = 0 : i64, tpu.core_type = #tpu.core_type<tc>, window_params = [{transform_indices = @transform_0, window_bounds = array<i64: 2, 8, 256>}, {transform_indices = @transform_1, window_bounds = array<i64: 8, 128>}]} {
    %cst = arith.constant 0.000000e+00 : f32
    %0 = vector.broadcast %cst : f32 to vector<8x128xf32>
    %c0 = arith.constant 0 : index
    %c0_0 = arith.constant 0 : index
    %c0_1 = arith.constant 0 : index
    %1 = vector.load %arg1[%c0, %c0_0, %c0_1] : memref<2x8x256xf32, #tpu.memory_space<vmem>>, vector<1x8x256xf32>
    %2 = vector.shape_cast %1 : vector<1x8x256xf32> to vector<8x256xf32>
    %3 = vector.extract_strided_slice %2 {offsets = [0, 0], sizes = [8, 128], strides = [1, 1]} : vector<8x256xf32> to vector<8x128xf32>
    %4 = arith.addf %0, %3 : vector<8x128xf32>
    %5 = vector.extract_strided_slice %2 {offsets = [0, 1], sizes = [8, 128], strides = [1, 1]} : vector<8x256xf32> to vector<8x128xf32>
    %6 = arith.addf %4, %5 : vector<8x128xf32>
    %7 = vector.extract_strided_slice %2 {offsets = [0, 2], sizes = [8, 128], strides = [1, 1]} : vector<8x256xf32> to vector<8x128xf32>
    %8 = arith.addf %6, %7 : vector<8x128xf32>
    %9 = vector.extract_strided_slice %2 {offsets = [0, 3], sizes = [8, 128], strides = [1, 1]} : vector<8x256xf32> to vector<8x128xf32>
    %10 = arith.addf %8, %9 : vector<8x128xf32>
    %c1 = arith.constant 1 : index
    %c0_2 = arith.constant 0 : index
    %c0_3 = arith.constant 0 : index
    %11 = vector.load %arg1[%c1, %c0_2, %c0_3] : memref<2x8x256xf32, #tpu.memory_space<vmem>>, vector<1x8x256xf32>
    %12 = vector.shape_cast %11 : vector<1x8x256xf32> to vector<8x256xf32>
    %13 = vector.extract_strided_slice %12 {offsets = [0, 0], sizes = [8, 128], strides = [1, 1]} : vector<8x256xf32> to vector<8x128xf32>
    %14 = arith.addf %10, %13 : vector<8x128xf32>
    %15 = vector.extract_strided_slice %12 {offsets = [0, 1], sizes = [8, 128], strides = [1, 1]} : vector<8x256xf32> to vector<8x128xf32>
    %16 = arith.addf %14, %15 : vector<8x128xf32>
    %17 = vector.extract_strided_slice %12 {offsets = [0, 2], sizes = [8, 128], strides = [1, 1]} : vector<8x256xf32> to vector<8x128xf32>
    %18 = arith.addf %16, %17 : vector<8x128xf32>
    %19 = vector.extract_strided_slice %12 {offsets = [0, 3], sizes = [8, 128], strides = [1, 1]} : vector<8x256xf32> to vector<8x128xf32>
    %20 = arith.addf %18, %19 : vector<8x128xf32>
    %c0_4 = arith.constant 0 : index
    %c0_5 = arith.constant 0 : index
    %21 = vector.load %arg2[%c0_4, %c0_5] : memref<8x128xf32, #tpu.memory_space<vmem>>, vector<8x128xf32>
    tpu.vector_store %arg2[%c0_4, %c0_5], %20 {strides = array<i32>} : memref<8x128xf32, #tpu.memory_space<vmem>>, vector<8x128xf32>,
    return
  }
  func.func @transform_0(%arg0: i32) -> (i32, i32, i32) {
    %c0_i32 = arith.constant 0 : i32
    %c0_i32_0 = arith.constant 0 : i32
    %c0_i32_1 = arith.constant 0 : i32
    return %c0_i32, %arg0, %c0_i32_0 : i32, i32, i32
  }
  func.func @transform_1(%arg0: i32) -> (i32, i32) {
    %c0_i32 = arith.constant 0 : i32
    %c0_i32_0 = arith.constant 0 : i32
    return %arg0, %c0_i32 : i32, i32
  }
}

</mosaic_0001>

<llo_original>
// kernel: tpu_custom_call.1
$region0: #{tpu_custom_call.1}
  #allocation0 [shape = 'u32[]', space=smem, size = 0x4, offset = 0x4, fixed_abs, tag = 'smem constant byte address 0x4 - core index']
  #allocation1 [shape = 'u32[144,128]{1,0:T(1,128)}', space=vmem, size = 0x12000, scoped, tag = 'internal scratch']
  %s0 = inlined_call_operand.hbm [shape: f32[2,8,256], index: 0, kind: input, shape index: {}]
  %s1 = inlined_call_operand.hbm [shape: f32[8,128], index: 1, kind: output, shape index: {}]
  %s2 = sld [smem:[#allocation0]]
  $region18: #{tpu_custom_call.1} parent=0
    _
  %s4 = ssub.s32 1, %s2
  %s5 = scalar_select 0, %s4, %s2
  $region1: #{tpu_custom_call.1} parent=0
    #allocation2 [shape = 'u8[16384]{0}', space=vmem, size = 0x4000, scoped, tag = 'input window, operand 0, single buffered']
    #allocation3 [shape = 's32[1]{0}', space=sflag, size = 0x4, scoped, tag = 'scoped memory for tpu_custom_call.1']
    #allocation4 [shape = 's32[1]{0}', space=sflag, size = 0x4, scoped, tag = 'scoped memory for tpu_custom_call.1']
    #allocation5 [shape = 'u8[4096]{0}', space=vmem, size = 0x1000, scoped, tag = 'output window, operand 0, single buffered']
    %6 = vsyncpa [#allocation3], 0
    %7 = vsyncpa [#allocation4], 0
    // Predicated region
    $region2: #{tpu_custom_call.1} parent=1 // pred_check
      _
    $region3: #{tpu_custom_call.1} parent=1 // pred_check_branch
      %9 = sbr.rel (0) target = $region5
    $region4: #{tpu_custom_call.1} parent=1 // pred_region
      %s11 = ssub.s32 512, 512
      %12 = vsyncadd [#allocation3], %s11
      %s13 = sshll.u32 [#allocation2], 4
      %s14 = int_to_ptr.vmem [resolvable:$true] %s13
      %19 = dma.hbm_to_vmem [thread:$0]  %s0, 512, %s14, [#allocation3], 256, 256, 16
    $region5: #{tpu_custom_call.1} parent=1 // pred_fallthru
      _
    // Predicated region
    $region6: #{tpu_custom_call.1} parent=1 // pred_check
      _
    $region7: #{tpu_custom_call.1} parent=1 // pred_check_branch
      %21 = sbr.rel (0) target = $region9
    $region8: #{tpu_custom_call.1} parent=1 // pred_region
      %22 = dma.done [#allocation3], 512
    $region9: #{tpu_custom_call.1} parent=1 // pred_fallthru
      _
    %v23 = vld [vmem:[#allocation2] sm:$0xff]
    %v24 = vld [vmem:[#allocation2 + $0x8] sm:$0xff]
    %v25 = vadd.f32 %v23, 0.0
    %28 = vrot.lane.b32.xlu0 %v23, 127
    %v29 = vpop.permute.xlu0 %28
    %30 = vrot.lane.b32.xlu0 %v24, 127
    %v31 = vpop.permute.xlu0 %30
    %vm32 = vcmask 1039360
    %v33 = vsel %vm32, %v29, %v31
    %v35 = vadd.f32 %v25, %v33
    %36 = vrot.lane.b32.xlu0 %v23, 126
    %v37 = vpop.permute.xlu0 %36
    %38 = vrot.lane.b32.xlu0 %v24, 126
    %v39 = vpop.permute.xlu0 %38
    %vm40 = vcmask 1031168
    %v41 = vsel %vm40, %v37, %v39
    %v43 = vadd.f32 %v35, %v41
    %44 = vrot.lane.b32.xlu0 %v23, 125
    %v45 = vpop.permute.xlu0 %44
    %46 = vrot.lane.b32.xlu0 %v24, 125
    %v47 = vpop.permute.xlu0 %46
    %vm48 = vcmask 1022976
    %v49 = vsel %vm48, %v45, %v47
    %v51 = vadd.f32 %v43, %v49
    %s52 = scalar_lea.vmem [#allocation2], 16
    %v53 = vld [vmem:[%s52] sm:$0xff]
    %v54 = vld [vmem:[%s52 + $0x8] sm:$0xff]
    %v55 = vadd.f32 %v51, %v53
    %58 = vrot.lane.b32.xlu0 %v53, 127
    %v59 = vpop.permute.xlu0 %58
    %60 = vrot.lane.b32.xlu0 %v54, 127
    %v61 = vpop.permute.xlu0 %60
    %v62 = vsel %vm32, %v59, %v61
    %v64 = vadd.f32 %v55, %v62
    %65 = vrot.lane.b32.xlu0 %v53, 126
    %v66 = vpop.permute.xlu0 %65
    %67 = vrot.lane.b32.xlu0 %v54, 126
    %v68 = vpop.permute.xlu0 %67
    %v69 = vsel %vm40, %v66, %v68
    %v71 = vadd.f32 %v64, %v69
    %72 = vrot.lane.b32.xlu0 %v53, 125
    %v73 = vpop.permute.xlu0 %72
    %74 = vrot.lane.b32.xlu0 %v54, 125
    %v75 = vpop.permute.xlu0 %74
    %v76 = vsel %vm48, %v73, %v75
    %v78 = vadd.f32 %v71, %v76
    %79 = vst [vmem:[#allocation5] sm:$0xff] %v78
    // Predicated region
    $region10: #{tpu_custom_call.1} parent=1 // pred_check
      _
    $region11: #{tpu_custom_call.1} parent=1 // pred_check_branch
      %81 = sbr.rel (0) target = $region13
    $region12: #{tpu_custom_call.1} parent=1 // pred_region
      %s83 = ssub.s32 128, 128
      %84 = vsyncadd [#allocation4], %s83
      %s86 = sshll.u32 [#allocation5], 4
      %s87 = int_to_ptr.vmem [resolvable:$true] %s86
      %89 = dma.vmem_to_hbm [thread:$0]  %s87, 128, %s1, [#allocation4]
    $region13: #{tpu_custom_call.1} parent=1 // pred_fallthru
      _
    // Predicated region
    $region14: #{tpu_custom_call.1} parent=1 // pred_check
      _
    $region15: #{tpu_custom_call.1} parent=1 // pred_check_branch
      %91 = sbr.rel (0) target = $region17
    $region16: #{tpu_custom_call.1} parent=1 // pred_region
      %92 = dma.done [#allocation4], 128
    $region17: #{tpu_custom_call.1} parent=1 // pred_fallthru
      _
    %93 = vsyncpa [#allocation3], 1
    %94 = vsyncpa [#allocation4], 1

</llo_original>
